<compile_context>
chip_gen: v6e
topology: v6e:2x2x1
jax: 0.10.0
libtpu: 0.0.40
codegen_flags: <defaults>
</compile_context>

<pallas_src>
import functools

import jax
import jax.numpy as jnp
from jax.experimental import pallas as pl
from jax.experimental.pallas import tpu as pltpu


def _silu_kernel(x_ref, o_ref):
    x = x_ref[...]
    half = jnp.asarray(0.5, dtype=x.dtype)
    one = jnp.asarray(1.0, dtype=x.dtype)
    # func(x) = x * sigmoid(x), rewritten with a single EUP transcendental:
    #   sigmoid(x) == 0.5 * (1 + tanh(0.5 * x))   (exact identity)
    o_ref[...] = (half * x * (one + jnp.tanh(half * x))).astype(o_ref.dtype)


def _silu_ref(x):
    # Plain-JAX fallback (tiny inputs / <128-element ragged tail).
    return x * jax.nn.sigmoid(x)


# Candidate lane-dense widths (largest first). All are multiples of 128.
_LANE_CANDIDATES = (4096, 2048, 1024, 512, 256, 128)
# Below this size, XLA's fused elementwise op beats the pallas_call boundary.
_MIN_PALLAS_BYTES = 256 * 1024
# Above this size, force >= 2 grid steps so the "parallel" axis can shard
# across both v7x TensorCores.
_MIN_SPLIT_BYTES = 4 * 1024 * 1024


@functools.lru_cache(maxsize=1)
def _tile_config():
    """(per-buffer tile bytes, vmem_limit_bytes-or-None), generation aware."""
    kind = ""
    try:
        kind = jax.devices()[0].device_kind.lower()
    except Exception:
        pass
    if "v7" in kind:
        # ~6 MiB per buffer; in+out double-buffered ~= 24 MiB resident, inside
        # a raised 48 MiB scoped limit (64 MiB physical VMEM per TC on v7x).
        return 6 * 1024 * 1024, 48 << 20
    # v5e: default scoped VMEM is only 16 MiB -> stay at 2 MiB/buffer (8 MiB
    # resident).  v6e is already ~85% of HBM roofline at this tile size.
    return 2 * 1024 * 1024, None


def _silu_pallas_2d(x2d, donate_input=False):
    rows, lanes = x2d.shape
    itemsize = jnp.dtype(x2d.dtype).itemsize
    tile_bytes, vmem_limit = _tile_config()

    # Row-block: multiple of 32 sublanes (full-width loads/stores for f32 /
    # bf16 / 8-bit packing), capped near the per-buffer tile target.
    target_rows = max(32, (tile_bytes // (lanes * itemsize) // 32) * 32)
    block_rows = rows if rows <= target_rows else target_rows

    # Megacore: keep at least 2 grid steps once the slab is big enough that
    # splitting it is worth the extra per-step overhead.
    if rows * lanes * itemsize >= _MIN_SPLIT_BYTES:
        half_rows = max(32, (((rows + 1) // 2) // 32) * 32)
        block_rows = min(block_rows, half_rows)

    grid = (pl.cdiv(rows, block_rows),)

    return pl.pallas_call(
        _silu_kernel,
        out_shape=jax.ShapeDtypeStruct((rows, lanes), x2d.dtype),
        grid_spec=pltpu.PrefetchScalarGridSpec(
            num_scalar_prefetch=0,
            grid=grid,
            in_specs=[pl.BlockSpec((block_rows, lanes), lambda i: (i, 0))],
            out_specs=pl.BlockSpec((block_rows, lanes), lambda i: (i, 0)),
        ),
        input_output_aliases={0: 0} if donate_input else {},
        compiler_params=pltpu.CompilerParams(
            dimension_semantics=("parallel",),
            vmem_limit_bytes=vmem_limit,
        ),
    )(x2d)


def lambda_module_forward(x, *, force_pallas=False, donate_input=False):
    """Applies func(x) = x * sigmoid(x) elementwise via a Pallas TPU kernel.

    Elementwise semantics are layout-invariant, so the wrapper reshapes to a
    lane-dense 2-D slab (zero-copy when the element count divides a 128-wide
    lane candidate) and restores the original shape afterwards.
    """
    orig_shape = x.shape
    orig_dtype = x.dtype

    if not jnp.issubdtype(orig_dtype, jnp.floating):
        raise TypeError(
            "LambdaModule(SiLU) Pallas kernel requires a floating dtype, got "
            f"{orig_dtype}"
        )
    if str(orig_dtype) == "float64":
        raise TypeError(
            "float64 is not supported by Mosaic on TPU; cast to float32/bfloat16 first"
        )

    n = x.size
    itemsize = jnp.dtype(orig_dtype).itemsize

    if n == 0:
        return x
    if not force_pallas and n * itemsize < _MIN_PALLAS_BYTES:
        # Tiny activation: the fused XLA elementwise op is strictly faster
        # than paying the pallas_call / pipeline setup cost.
        return _silu_ref(x)

    # Pick the widest lane-dense last dim that divides n exactly (zero-copy path).
    lanes = next((c for c in _LANE_CANDIDATES if n % c == 0), None)

    x_flat = jnp.ravel(x)

    if lanes is not None:
        n_aligned, tail = n, 0
        head = x_flat.reshape(n_aligned // lanes, lanes)
    else:
        # Ragged fallback: kernel on the 128-aligned prefix, <128-element tail
        # in plain JAX (no full-array pad / slice passes over HBM).
        n_aligned = (n // 128) * 128
        tail = n - n_aligned
        if n_aligned == 0:
            return _silu_ref(x)
        lanes = next(c for c in _LANE_CANDIDATES if n_aligned % c == 0)
        head = x_flat[:n_aligned].reshape(n_aligned // lanes, lanes)

    out_flat = _silu_pallas_2d(head, donate_input=donate_input).reshape(-1)

    if tail:
        tail_out = _silu_ref(x_flat[n_aligned:])
        out_flat = jnp.concatenate([out_flat, tail_out])

    return out_flat.reshape(orig_shape)


if __name__ == "__main__":
    key = jax.random.PRNGKey(0)
    k1, k2 = jax.random.split(key)

    # Small NCHW input consistent with a typical conv-net activation.
    x = jax.random.normal(k1, (2, 4, 16, 16), dtype=jnp.float32)
    y = jax.block_until_ready(lambda_module_forward(x, force_pallas=True))
    y_ref = x * jax.nn.sigmoid(x)
    assert y.shape == x.shape and y.dtype == x.dtype
    assert jnp.allclose(y, y_ref, atol=1e-5, rtol=1e-5)

    # Ragged element count (222): exercises aligned-prefix + plain-JAX tail.
    x2 = jax.random.normal(k2, (2, 3, 37), dtype=jnp.float32)
    y2 = jax.block_until_ready(lambda_module_forward(x2, force_pallas=True))
    y2_ref = x2 * jax.nn.sigmoid(x2)
    assert y2.shape == x2.shape and y2.dtype == x2.dtype
    assert jnp.allclose(y2, y2_ref, atol=1e-5, rtol=1e-5)

    # Default path: tiny input short-circuits to fused XLA elementwise.
    y3 = jax.block_until_ready(lambda_module_forward(x))
    assert jnp.allclose(y3, y_ref, atol=1e-5, rtol=1e-5)

    print("KERNEL_OK")
</pallas_src>

<mosaic_0001>
module attributes {stable_mosaic.version = 11 : i64} {
  func.func @_silu_kernel(%arg0: i32, %arg1: memref<1x2048xf32, #tpu.memory_space<vmem>>, %arg2: memref<1x2048xf32, #tpu.memory_space<vmem>>) attributes {dimension_semantics = [#tpu.dimension_semantics<parallel>], iteration_bounds = array<i64: 1>, scalar_prefetch = 0 : i64, scratch_operands = 0 : i64, tpu.core_type = #tpu.core_type<tc>, window_params = [{transform_indices = @transform_0, window_bounds = array<i64: 1, 2048>}, {transform_indices = @transform_1, window_bounds = array<i64: 1, 2048>}]} {
    %c0 = arith.constant 0 : index
    %c0_0 = arith.constant 0 : index
    %0 = vector.load %arg1[%c0, %c0_0] : memref<1x2048xf32, #tpu.memory_space<vmem>>, vector<1x2048xf32>
    %cst = arith.constant 5.000000e-01 : f32
    %1 = vector.broadcast %cst : f32 to vector<1x2048xf32>
    %2 = arith.mulf %1, %0 : vector<1x2048xf32>
    %cst_1 = arith.constant 5.000000e-01 : f32
    %3 = vector.broadcast %cst_1 : f32 to vector<1x2048xf32>
    %4 = arith.mulf %3, %0 : vector<1x2048xf32>
    %5 = math.tanh %4 : vector<1x2048xf32>
    %cst_2 = arith.constant 1.000000e+00 : f32
    %6 = vector.broadcast %cst_2 : f32 to vector<1x2048xf32>
    %7 = arith.addf %6, %5 : vector<1x2048xf32>
    %8 = arith.mulf %2, %7 : vector<1x2048xf32>
    %c0_3 = arith.constant 0 : index
    %c0_4 = arith.constant 0 : index
    %9 = vector.load %arg2[%c0_3, %c0_4] : memref<1x2048xf32, #tpu.memory_space<vmem>>, vector<1x2048xf32>
    tpu.vector_store %arg2[%c0_3, %c0_4], %8 {strides = array<i32>} : memref<1x2048xf32, #tpu.memory_space<vmem>>, vector<1x2048xf32>,
    return
  }
  func.func @transform_0(%arg0: i32) -> (i32, i32) {
    %c0_i32 = arith.constant 0 : i32
    %c0_i32_0 = arith.constant 0 : i32
    return %arg0, %c0_i32 : i32, i32
  }
  func.func @transform_1(%arg0: i32) -> (i32, i32) {
    %c0_i32 = arith.constant 0 : i32
    %c0_i32_0 = arith.constant 0 : i32
    return %arg0, %c0_i32 : i32, i32
  }
}

</mosaic_0001>

<llo_original>
// kernel: tpu_custom_call.1
$region0: #{tpu_custom_call.1}
  #allocation0 [shape = 'u32[]', space=smem, size = 0x4, offset = 0x4, fixed_abs, tag = 'smem constant byte address 0x4 - core index']
  #allocation1 [shape = 'u32[144,128]{1,0:T(1,128)}', space=vmem, size = 0x12000, scoped, tag = 'internal scratch']
  %s0 = inlined_call_operand.hbm [shape: f32[1,2048], index: 0, kind: input, shape index: {}]
  %s1 = inlined_call_operand.hbm [shape: f32[1,2048], index: 1, kind: output, shape index: {}]
  %s2 = sld [smem:[#allocation0]]
  $region18: #{tpu_custom_call.1} parent=0
    _
  %s4 = ssub.s32 1, %s2
  %s5 = scalar_select 0, %s4, %s2
  $region1: #{tpu_custom_call.1} parent=0
    #allocation2 [shape = 'u8[8192]{0}', space=vmem, size = 0x2000, scoped, tag = 'input window, operand 0, single buffered']
    #allocation3 [shape = 's32[1]{0}', space=sflag, size = 0x4, scoped, tag = 'scoped memory for tpu_custom_call.1']
    #allocation4 [shape = 's32[1]{0}', space=sflag, size = 0x4, scoped, tag = 'scoped memory for tpu_custom_call.1']
    #allocation5 [shape = 'u8[8192]{0}', space=vmem, size = 0x2000, scoped, tag = 'output window, operand 0, single buffered']
    %6 = vsyncpa [#allocation3], 0
    %7 = vsyncpa [#allocation4], 0
    // Predicated region
    $region2: #{tpu_custom_call.1} parent=1 // pred_check
      _
    $region3: #{tpu_custom_call.1} parent=1 // pred_check_branch
      %9 = sbr.rel (0) target = $region5
    $region4: #{tpu_custom_call.1} parent=1 // pred_region
      %s11 = ssub.s32 256, 256
      %12 = vsyncadd [#allocation3], %s11
      %s14 = sshll.u32 [#allocation2], 4
      %s15 = int_to_ptr.vmem [resolvable:$true] %s14
      %17 = dma.hbm_to_vmem [thread:$0]  %s0, 256, %s15, [#allocation3]
    $region5: #{tpu_custom_call.1} parent=1 // pred_fallthru
      _
    // Predicated region
    $region6: #{tpu_custom_call.1} parent=1 // pred_check
      _
    $region7: #{tpu_custom_call.1} parent=1 // pred_check_branch
      %19 = sbr.rel (0) target = $region9
    $region8: #{tpu_custom_call.1} parent=1 // pred_region
      %20 = dma.done [#allocation3], 256
    $region9: #{tpu_custom_call.1} parent=1 // pred_fallthru
      _
    %v21 = vld [vmem:[#allocation2] sm:$0xff]
    %v22 = vld [vmem:[#allocation2 + $0x8] sm:$0xff]
    %v23 = vmul.f32 %v21, 0.5
    %v24 = vmul.f32 %v22, 0.5
    %v25 = vtanh.pop %v23
    %v26 = vtanh.pop %v24
    %v27 = vadd.f32 %v25, 1.0
    %v28 = vadd.f32 %v26, 1.0
    %v29 = vmul.f32 %v23, %v27
    %v30 = vmul.f32 %v24, %v28
    %31 = vst [vmem:[#allocation5] sm:$0xff] %v29
    %32 = vst [vmem:[#allocation5 + $0x8] sm:$0xff] %v30
    // Predicated region
    $region10: #{tpu_custom_call.1} parent=1 // pred_check
      _
    $region11: #{tpu_custom_call.1} parent=1 // pred_check_branch
      %34 = sbr.rel (0) target = $region13
    $region12: #{tpu_custom_call.1} parent=1 // pred_region
      %s36 = ssub.s32 256, 256
      %37 = vsyncadd [#allocation4], %s36
      %s39 = sshll.u32 [#allocation5], 4
      %s40 = int_to_ptr.vmem [resolvable:$true] %s39
      %42 = dma.vmem_to_hbm [thread:$0]  %s40, 256, %s1, [#allocation4]
    $region13: #{tpu_custom_call.1} parent=1 // pred_fallthru
      _
    // Predicated region
    $region14: #{tpu_custom_call.1} parent=1 // pred_check
      _
    $region15: #{tpu_custom_call.1} parent=1 // pred_check_branch
      %44 = sbr.rel (0) target = $region17
    $region16: #{tpu_custom_call.1} parent=1 // pred_region
      %45 = dma.done [#allocation4], 256
    $region17: #{tpu_custom_call.1} parent=1 // pred_fallthru
      _
    %46 = vsyncpa [#allocation3], 1
    %47 = vsyncpa [#allocation4], 1

</llo_original>
